<compile_context>
chip_gen: v6e
topology: v6e:2x2x1
jax: 0.10.0
libtpu: 0.0.40
codegen_flags: <defaults>
</compile_context>

<pallas_src>
import functools

import jax
import jax.numpy as jnp
from jax.experimental import pallas as pl
from jax.experimental.pallas import tpu as pltpu

_LANE = 128          # vreg lane width (last-dim granule)
_BF16_SUBLANE = 16   # bf16 sublane packing granule -> batch-tile granule


def _round_up(n, m):
    return ((n + m - 1) // m) * m


def _cdiv(a, b):
    return (a + b - 1) // b


# ----------------------------- kernel ---------------------------------------
def mlp_kernel(x_ref, w1_ref, b1_ref, w2_ref, b2_ref, w3_ref, b3_ref, o_ref):
    # x arrives as f32; cast to bf16 in-register (VPU) so the wrapper never
    # re-materializes x in bf16 in HBM.
    x = x_ref[...].astype(w1_ref.dtype)
    # Layer 1: bf16 MXU matmul, f32 accumulation, f32 bias + tanh (EUP).
    # (Dropout -> identity, eval mode.)
    h1 = jnp.tanh(
        jnp.dot(x, w1_ref[...], preferred_element_type=jnp.float32)
        + b1_ref[...]
    )
    # Layer 2: same pattern; cast activation to bf16 only for the MXU input.
    h2 = jnp.tanh(
        jnp.dot(h1.astype(w2_ref.dtype), w2_ref[...],
                preferred_element_type=jnp.float32)
        + b2_ref[...]
    )
    # Layer 3 (output head).
    o_ref[...] = (
        jnp.dot(h2.astype(w3_ref.dtype), w3_ref[...],
                preferred_element_type=jnp.float32)
        + b3_ref[...]
    ).astype(o_ref.dtype)


# ------------------------ one-time weight preparation -----------------------
def prepare_params(params, compute_dtype=jnp.bfloat16):
    """One-time pad (lane granule) + bf16 cast of the weights.

    Call once outside the jitted forward; the per-call forward then only
    streams x and the output through the kernel.
    Padding is an exact no-op: tanh(0+0)=0 and zero rows/cols contribute 0.
    """
    w1, b1 = params["w1"], params["b1"]
    w2, b2 = params["w2"], params["b2"]
    w3, b3 = params["w3"], params["b3"]
    h1_f, h2_f, out_f = w1.shape[1], w2.shape[1], w3.shape[1]

    h1_p = _round_up(h1_f, _LANE)
    h2_p = _round_up(h2_f, _LANE)
    # Lane-dense padding for the output head only when it is already wide;
    # for a narrow head (< 128) masked stores beat 32x padded output bytes.
    out_p = _round_up(out_f, _LANE) if out_f >= _LANE else out_f

    return {
        "w1": jnp.pad(w1, ((0, 0), (0, h1_p - h1_f))).astype(compute_dtype),
        "b1": jnp.pad(b1, ((0, 0), (0, h1_p - h1_f))).astype(jnp.float32),
        "w2": jnp.pad(w2, ((0, h1_p - h1_f), (0, h2_p - h2_f))).astype(compute_dtype),
        "b2": jnp.pad(b2, ((0, 0), (0, h2_p - h2_f))).astype(jnp.float32),
        "w3": jnp.pad(w3, ((0, h2_p - h2_f), (0, out_p - out_f))).astype(compute_dtype),
        "b3": jnp.pad(b3, ((0, 0), (0, out_p - out_f))).astype(jnp.float32),
    }


# ------------------------------- forward ------------------------------------
def deep_learning_forward(x, prepared, out_features=None, *,
                          tile_b_cap=1024, min_grid_steps=1,
                          vmem_budget_bytes=40 * 1024 * 1024):
    """x: [B, input_features] float32. prepared: output of prepare_params."""
    w1, b1 = prepared["w1"], prepared["b1"]
    w2, b2 = prepared["w2"], prepared["b2"]
    w3, b3 = prepared["w3"], prepared["b3"]

    B, in_f = x.shape
    h1_p, h2_p, out_p = w1.shape[1], w2.shape[1], w3.shape[1]
    out_f = out_p if out_features is None else out_features

    # ---- batch tiling -------------------------------------------------------
    # Bound ragged-padding waste: tile_b ~ round_up(B / n_tiles, 16) so at most
    # <16 dead rows in the last (masked) tile.  min_grid_steps=2 gives v7x's
    # two TensorCores something to shard; v5e/v6e prefer the largest tile (=1).
    n_tiles = max(_cdiv(B, tile_b_cap), min_grid_steps, 1)
    tile_b = max(_BF16_SUBLANE, _round_up(_cdiv(B, n_tiles), _BF16_SUBLANE))

    # ---- static VMEM budget check (v7x has only 64 MiB VMEM) ----------------
    def vmem_estimate(tb):
        w_bytes = (w1.size + w2.size + w3.size) * w1.dtype.itemsize   # Buffered(1) residents
        bias_bytes = (b1.size + b2.size + b3.size) * 4
        io_bytes = 2 * tb * in_f * x.dtype.itemsize + 2 * tb * out_p * 4  # double-buffered streams
        act_bytes = tb * (h1_p + h2_p) * 4                            # f32 intermediates
        return w_bytes + bias_bytes + io_bytes + act_bytes

    while vmem_estimate(tile_b) > vmem_budget_bytes and tile_b > _BF16_SUBLANE:
        tile_b = max(_BF16_SUBLANE, _round_up(tile_b // 2, _BF16_SUBLANE))
    # TODO(synk): if the resident weights alone exceed the budget (very large
    # hidden sizes), split w2/w3 over an extra reduction grid axis (K-tiling
    # with an f32 acc scratch and pl.when init/finalize) instead.

    grid = (_cdiv(B, tile_b),)   # ragged last tile: OOB rows masked by Pallas
    vmem_limit = int(min(max(vmem_estimate(tile_b) + (8 << 20), 32 << 20), 48 << 20))

    # Grid-invariant blocks: DMA'd once, single VMEM buffer.
    def _resident(shape):
        try:
            return pl.BlockSpec(shape, lambda i: (0, 0), pipeline_mode=pl.Buffered(1))
        except TypeError:   # very old jax without pipeline_mode on BlockSpec
            return pl.BlockSpec(shape, lambda i: (0, 0))

    # Advisory cost estimate using the shapes the kernel actually executes.
    rows = grid[0] * tile_b
    flops = 2 * rows * (in_f * h1_p + h1_p * h2_p + h2_p * out_p)
    transcendentals = rows * (h1_p + h2_p)
    bytes_accessed = int(
        rows * in_f * x.dtype.itemsize
        + (w1.size + w2.size + w3.size) * w1.dtype.itemsize
        + (b1.size + b2.size + b3.size) * 4
        + rows * out_p * 4
    )

    out = pl.pallas_call(
        mlp_kernel,
        out_shape=jax.ShapeDtypeStruct((B, out_p), jnp.float32),
        grid=grid,
        in_specs=[
            pl.BlockSpec((tile_b, in_f), lambda i: (i, 0)),   # x: streamed f32
            _resident((in_f, h1_p)),                          # w1
            _resident((1, h1_p)),                             # b1
            _resident((h1_p, h2_p)),                          # w2
            _resident((1, h2_p)),                             # b2
            _resident((h2_p, out_p)),                         # w3
            _resident((1, out_p)),                            # b3
        ],
        out_specs=pl.BlockSpec((tile_b, out_p), lambda i: (i, 0)),
        compiler_params=pltpu.CompilerParams(
            dimension_semantics=("parallel",),   # megacore sharding on v7x
            vmem_limit_bytes=vmem_limit,
        ),
        cost_estimate=pl.CostEstimate(
            flops=flops,
            transcendentals=transcendentals,
            bytes_accessed=bytes_accessed,
        ),
    )(x, w1, b1, w2, b2, w3, b3)

    # Lane slice only needed when the head was lane-padded (out_f >= 128).
    return out if out_p == out_f else out[:, :out_f]


# ------------------------------ init / reference ----------------------------
def init_params(key, input_features, hidden_features, output_features):
    """Deterministic init mimicking nn.Linear default U[-1/sqrt(fan_in), 1/sqrt(fan_in)]."""
    h2 = hidden_features // 2
    dims = [
        (input_features, hidden_features),
        (hidden_features, h2),
        (h2, output_features),
    ]
    params = {}
    for i, (fan_in, fan_out) in enumerate(dims, start=1):
        key, kw, kb = jax.random.split(key, 3)
        bound = 1.0 / jnp.sqrt(jnp.float32(fan_in))
        # stored as [in, out] so the kernel computes x @ W
        params[f"w{i}"] = jax.random.uniform(
            kw, (fan_in, fan_out), jnp.float32, -bound, bound
        )
        # bias kept 2D [1, out] for clean TPU layout / broadcasting
        params[f"b{i}"] = jax.random.uniform(
            kb, (1, fan_out), jnp.float32, -bound, bound
        )
    return params


def reference_forward(x, params, compute_dtype=jnp.bfloat16):
    """Pure-JAX reference using the same mixed-precision recipe as the kernel."""
    cd = compute_dtype
    h1 = jnp.tanh(
        jnp.dot(x.astype(cd), params["w1"].astype(cd),
                preferred_element_type=jnp.float32) + params["b1"]
    )
    h2 = jnp.tanh(
        jnp.dot(h1.astype(cd), params["w2"].astype(cd),
                preferred_element_type=jnp.float32) + params["b2"]
    )
    return (
        jnp.dot(h2.astype(cd), params["w3"].astype(cd),
                preferred_element_type=jnp.float32) + params["b3"]
    )


if __name__ == "__main__":
    batch = 64
    input_features = 32
    hidden_features = 32
    output_features = 4

    key = jax.random.PRNGKey(0)
    key, kx = jax.random.split(key)
    x = jax.random.normal(kx, (batch, input_features), jnp.float32)
    params = init_params(key, input_features, hidden_features, output_features)

    prepared = prepare_params(params)   # one-time pad + bf16 cast (outside jit)
    fwd = jax.jit(deep_learning_forward, static_argnames=("out_features",))
    out = fwd(x, prepared, out_features=output_features)
    out = jax.block_until_ready(out)

    ref = reference_forward(x, params)
    assert out.shape == (batch, output_features)
    assert jnp.allclose(out, ref, atol=1e-2, rtol=1e-2), "mismatch vs JAX reference"

    print("KERNEL_OK")
</pallas_src>

<mosaic_0001>
module attributes {stable_mosaic.version = 11 : i64} {
  func.func @mlp_kernel(%arg0: i32, %arg1: memref<64x32xf32, #tpu.memory_space<vmem>>, %arg2: memref<32x128xbf16, #tpu.memory_space<vmem>>, %arg3: memref<1x128xf32, #tpu.memory_space<vmem>>, %arg4: memref<128x128xbf16, #tpu.memory_space<vmem>>, %arg5: memref<1x128xf32, #tpu.memory_space<vmem>>, %arg6: memref<128x4xbf16, #tpu.memory_space<vmem>>, %arg7: memref<1x4xf32, #tpu.memory_space<vmem>>, %arg8: memref<64x4xf32, #tpu.memory_space<vmem>>) attributes {dimension_semantics = [#tpu.dimension_semantics<parallel>], iteration_bounds = array<i64: 1>, scalar_prefetch = 0 : i64, scratch_operands = 0 : i64, tpu.core_type = #tpu.core_type<tc>, window_params = [{transform_indices = @transform_0, window_bounds = array<i64: 64, 32>}, {pipeline_mode = #tpu.pipeline_mode<synchronous>, transform_indices = @transform_1, window_bounds = array<i64: 32, 128>}, {pipeline_mode = #tpu.pipeline_mode<synchronous>, transform_indices = @transform_2, window_bounds = array<i64: 1, 128>}, {pipeline_mode = #tpu.pipeline_mode<synchronous>, transform_indices = @transform_3, window_bounds = array<i64: 128, 128>}, {pipeline_mode = #tpu.pipeline_mode<synchronous>, transform_indices = @transform_4, window_bounds = array<i64: 1, 128>}, {pipeline_mode = #tpu.pipeline_mode<synchronous>, transform_indices = @transform_5, window_bounds = array<i64: 128, 4>}, {pipeline_mode = #tpu.pipeline_mode<synchronous>, transform_indices = @transform_6, window_bounds = array<i64: 1, 4>}, {transform_indices = @transform_7, window_bounds = array<i64: 64, 4>}]} {
    %c0 = arith.constant 0 : index
    %c0_0 = arith.constant 0 : index
    %0 = vector.load %arg1[%c0, %c0_0] : memref<64x32xf32, #tpu.memory_space<vmem>>, vector<64x32xf32>
    %1 = arith.truncf %0 : vector<64x32xf32> to vector<64x32xbf16>
    %c0_1 = arith.constant 0 : index
    %c0_2 = arith.constant 0 : index
    %2 = vector.load %arg2[%c0_1, %c0_2] : memref<32x128xbf16, #tpu.memory_space<vmem>>, vector<32x128xbf16>
    %cst = arith.constant dense<0.000000e+00> : vector<64x128xf32>
    %3 = tpu.matmul %1, %2, %cst {dimension_numbers = #tpu.dot_dimension_numbers<[1], [0], [0], [1], [0, 0, 1, 1], [], []>} : vector<64x32xbf16>, vector<32x128xbf16>, vector<64x128xf32> -> vector<64x128xf32>
    %c0_3 = arith.constant 0 : index
    %c0_4 = arith.constant 0 : index
    %4 = vector.load %arg3[%c0_3, %c0_4] : memref<1x128xf32, #tpu.memory_space<vmem>>, vector<1x128xf32>
    %5 = vector.broadcast %4 : vector<1x128xf32> to vector<64x128xf32>
    %6 = arith.addf %3, %5 : vector<64x128xf32>
    %7 = math.tanh %6 : vector<64x128xf32>
    %8 = arith.truncf %7 : vector<64x128xf32> to vector<64x128xbf16>
    %c0_5 = arith.constant 0 : index
    %c0_6 = arith.constant 0 : index
    %9 = vector.load %arg4[%c0_5, %c0_6] : memref<128x128xbf16, #tpu.memory_space<vmem>>, vector<128x128xbf16>
    %cst_7 = arith.constant dense<0.000000e+00> : vector<64x128xf32>
    %10 = tpu.matmul %8, %9, %cst_7 {dimension_numbers = #tpu.dot_dimension_numbers<[1], [0], [0], [1], [0, 0, 1, 1], [], []>} : vector<64x128xbf16>, vector<128x128xbf16>, vector<64x128xf32> -> vector<64x128xf32>
    %c0_8 = arith.constant 0 : index
    %c0_9 = arith.constant 0 : index
    %11 = vector.load %arg5[%c0_8, %c0_9] : memref<1x128xf32, #tpu.memory_space<vmem>>, vector<1x128xf32>
    %12 = vector.broadcast %11 : vector<1x128xf32> to vector<64x128xf32>
    %13 = arith.addf %10, %12 : vector<64x128xf32>
    %14 = math.tanh %13 : vector<64x128xf32>
    %15 = arith.truncf %14 : vector<64x128xf32> to vector<64x128xbf16>
    %c0_10 = arith.constant 0 : index
    %c0_11 = arith.constant 0 : index
    %16 = vector.load %arg6[%c0_10, %c0_11] : memref<128x4xbf16, #tpu.memory_space<vmem>>, vector<128x4xbf16>
    %cst_12 = arith.constant dense<0.000000e+00> : vector<64x4xf32>
    %17 = tpu.matmul %15, %16, %cst_12 {dimension_numbers = #tpu.dot_dimension_numbers<[1], [0], [0], [1], [0, 0, 1, 1], [], []>} : vector<64x128xbf16>, vector<128x4xbf16>, vector<64x4xf32> -> vector<64x4xf32>
    %c0_13 = arith.constant 0 : index
    %c0_14 = arith.constant 0 : index
    %18 = vector.load %arg7[%c0_13, %c0_14] : memref<1x4xf32, #tpu.memory_space<vmem>>, vector<1x4xf32>
    %19 = vector.broadcast %18 : vector<1x4xf32> to vector<64x4xf32>
    %20 = arith.addf %17, %19 : vector<64x4xf32>
    %c0_15 = arith.constant 0 : index
    %c0_16 = arith.constant 0 : index
    %21 = vector.load %arg8[%c0_15, %c0_16] : memref<64x4xf32, #tpu.memory_space<vmem>>, vector<64x4xf32>
    tpu.vector_store %arg8[%c0_15, %c0_16], %20 {strides = array<i32>} : memref<64x4xf32, #tpu.memory_space<vmem>>, vector<64x4xf32>,
    return
  }
  func.func @transform_0(%arg0: i32) -> (i32, i32) {
    %c0_i32 = arith.constant 0 : i32
    %c0_i32_0 = arith.constant 0 : i32
    return %arg0, %c0_i32 : i32, i32
  }
  func.func @transform_1(%arg0: i32) -> (i32, i32) {
    %c0_i32 = arith.constant 0 : i32
    %c0_i32_0 = arith.constant 0 : i32
    %c0_i32_1 = arith.constant 0 : i32
    return %c0_i32, %c0_i32_0 : i32, i32
  }
  func.func @transform_2(%arg0: i32) -> (i32, i32) {
    %c0_i32 = arith.constant 0 : i32
    %c0_i32_0 = arith.constant 0 : i32
    %c0_i32_1 = arith.constant 0 : i32
    return %c0_i32, %c0_i32_0 : i32, i32
  }
  func.func @transform_3(%arg0: i32) -> (i32, i32) {
    %c0_i32 = arith.constant 0 : i32
    %c0_i32_0 = arith.constant 0 : i32
    %c0_i32_1 = arith.constant 0 : i32
    return %c0_i32, %c0_i32_0 : i32, i32
  }
  func.func @transform_4(%arg0: i32) -> (i32, i32) {
    %c0_i32 = arith.constant 0 : i32
    %c0_i32_0 = arith.constant 0 : i32
    %c0_i32_1 = arith.constant 0 : i32
    return %c0_i32, %c0_i32_0 : i32, i32
  }
  func.func @transform_5(%arg0: i32) -> (i32, i32) {
    %c0_i32 = arith.constant 0 : i32
    %c0_i32_0 = arith.constant 0 : i32
    %c0_i32_1 = arith.constant 0 : i32
    return %c0_i32, %c0_i32_0 : i32, i32
  }
  func.func @transform_6(%arg0: i32) -> (i32, i32) {
    %c0_i32 = arith.constant 0 : i32
    %c0_i32_0 = arith.constant 0 : i32
    %c0_i32_1 = arith.constant 0 : i32
    return %c0_i32, %c0_i32_0 : i32, i32
  }
  func.func @transform_7(%arg0: i32) -> (i32, i32) {
    %c0_i32 = arith.constant 0 : i32
    %c0_i32_0 = arith.constant 0 : i32
    return %arg0, %c0_i32 : i32, i32
  }
}

</mosaic_0001>

<llo_original>
// kernel: deep_learning_forward.1
$region0: #{deep_learning_forward.1}
  #allocation0 [shape = 'u32[]', space=smem, size = 0x4, offset = 0x4, fixed_abs, tag = 'smem constant byte address 0x4 - core index']
  #allocation1 [shape = 'u32[144,128]{1,0:T(1,128)}', space=vmem, size = 0x12000, scoped, tag = 'internal scratch']
  %s0 = inlined_call_operand.vmem [shape: f32[64,32], index: 0, kind: input, shape index: {}]
  %s1 = inlined_call_operand.vmem [shape: bf16[32,128], index: 1, kind: input, shape index: {}]
  %s2 = inlined_call_operand.vmem [shape: f32[1,128], index: 2, kind: input, shape index: {}]
  %s3 = inlined_call_operand.vmem [shape: bf16[128,128], index: 3, kind: input, shape index: {}]
  %s4 = inlined_call_operand.vmem [shape: f32[1,128], index: 4, kind: input, shape index: {}]
  %s5 = inlined_call_operand.vmem [shape: bf16[128,4], index: 5, kind: input, shape index: {}]
  %s6 = inlined_call_operand.vmem [shape: f32[1,4], index: 6, kind: input, shape index: {}]
  %s7 = inlined_call_operand.vmem [shape: f32[64,4], index: 7, kind: output, shape index: {}]
  %s8 = sld [smem:[#allocation0]]
  $region38: #{deep_learning_forward.1} parent=0
    _
  %s10 = ssub.s32 1, %s8
  %s11 = scalar_select 0, %s10, %s8
  // Predicated region
  $region2: #{deep_learning_forward.1} parent=0 // pred_check
    _
  $region3: #{deep_learning_forward.1} parent=0 // pred_check_branch
    %13 = sbr.rel (0) target = $region5
  $region4: #{deep_learning_forward.1} parent=0 // pred_region
    _
  $region5: #{deep_learning_forward.1} parent=0 // pred_fallthru
    _
  // Predicated region
  $region6: #{deep_learning_forward.1} parent=0 // pred_check
    _
  $region7: #{deep_learning_forward.1} parent=0 // pred_check_branch
    %15 = sbr.rel (0) target = $region9
  $region8: #{deep_learning_forward.1} parent=0 // pred_region
    _
  $region9: #{deep_learning_forward.1} parent=0 // pred_fallthru
    _
  // Predicated region
  $region10: #{deep_learning_forward.1} parent=0 // pred_check
    _
  $region11: #{deep_learning_forward.1} parent=0 // pred_check_branch
    %17 = sbr.rel (0) target = $region13
  $region12: #{deep_learning_forward.1} parent=0 // pred_region
    _
  $region13: #{deep_learning_forward.1} parent=0 // pred_fallthru
    _
  // Predicated region
  $region14: #{deep_learning_forward.1} parent=0 // pred_check
    _
  $region15: #{deep_learning_forward.1} parent=0 // pred_check_branch
    %19 = sbr.rel (0) target = $region17
  $region16: #{deep_learning_forward.1} parent=0 // pred_region
    _
  $region17: #{deep_learning_forward.1} parent=0 // pred_fallthru
    _
  // Predicated region
  $region18: #{deep_learning_forward.1} parent=0 // pred_check
    _
  $region19: #{deep_learning_forward.1} parent=0 // pred_check_branch
    %21 = sbr.rel (0) target = $region21
  $region20: #{deep_learning_forward.1} parent=0 // pred_region
    _
  $region21: #{deep_learning_forward.1} parent=0 // pred_fallthru
    _
  // Predicated region
  $region22: #{deep_learning_forward.1} parent=0 // pred_check
    _
  $region23: #{deep_learning_forward.1} parent=0 // pred_check_branch
    %23 = sbr.rel (0) target = $region25
  $region24: #{deep_learning_forward.1} parent=0 // pred_region
    _
  $region25: #{deep_learning_forward.1} parent=0 // pred_fallthru
    _
  // Predicated region
  $region26: #{deep_learning_forward.1} parent=0 // pred_check
    _
  $region27: #{deep_learning_forward.1} parent=0 // pred_check_branch
    %25 = sbr.rel (0) target = $region29
  $region28: #{deep_learning_forward.1} parent=0 // pred_region
    _
  $region29: #{deep_learning_forward.1} parent=0 // pred_fallthru
    _
  %v27 = vld [vmem:[%s0] sm:$0xff]
  %v28 = vld [vmem:[%s0 + $0x8] sm:$0xff]
  %v29 = vld [vmem:[%s0 + $0x10] sm:$0xff]
  %v30 = vld [vmem:[%s0 + $0x18] sm:$0xff]
  %v31 = vld [vmem:[%s0 + $0x20] sm:$0xff]
  %v32 = vld [vmem:[%s0 + $0x28] sm:$0xff]
  %v33 = vld [vmem:[%s0 + $0x30] sm:$0xff]
  %v34 = vld [vmem:[%s0 + $0x38] sm:$0xff]
  %v35 = vpack.c.bf16 %v28, %v27
  %v36 = vpack.c.bf16 %v30, %v29
  %v37 = vpack.c.bf16 %v32, %v31
  %v38 = vpack.c.bf16 %v34, %v33
  %v39 = vld [vmem:[%s1] sm:$0xf]
  %v40 = vld [vmem:[%s1 + $0x4] sm:$0xf]
  %v41 = vld [vmem:[%s1 + $0x8] sm:$0xf]
  %v42 = vld [vmem:[%s1 + $0xc] sm:$0xf]
  %v43 = vld [vmem:[%s2] sm:$0x1]
  %v45 = vlaneseq
  %v46 = vshrl.u32 %v45, 7
  %v47 = vsub.s32 0, %v46
  %v48 = vrot.slane %v43, %v47
  %v54 = vunpack.c.l.b16 %v39
  %v55 = vunpack.c.l.b16 %v40
  %v56 = vunpack.c.l.b16 %v41
  %v57 = vunpack.c.l.b16 %v42
  %v58 = vpack.c.b16 %v55, %v54
  %v59 = vpack.c.b16 %v57, %v56
  %vm62 = vcmask 261120
  %v64 = vsel %vm62, %v35, 0
  %v67 = vsel %vm62, %v36, 0
  %v70 = vsel %vm62, %v37, 0
  %v73 = vsel %vm62, %v38, 0
  %75 = vmatprep.subr.bf16.mxu0 0
  %76 = vmatpush1.bf16.msra.mxu0 0
  %77 = vmatprep.subr.bf16.mxu0 0
  %78 = vmatpush1.bf16.msra.mxu0 0
  %79 = vmatprep.subr.bf16.mxu0 0
  %80 = vmatpush1.bf16.msra.mxu0 0
  %81 = vmatprep.subr.bf16.mxu0 0
  %82 = vmatpush1.bf16.msra.mxu0 0
  %83 = vmatprep.subr.bf16.mxu0 0
  %84 = vmatpush1.bf16.msra.mxu0 0
  %85 = vmatprep.subr.bf16.mxu0 0
  %86 = vmatpush1.bf16.msra.mxu0 0
  %87 = vmatprep.subr.bf16.mxu0 0
  %88 = vmatpush1.bf16.msra.mxu0 %v59
  %89 = vmatprep.subr.bf16.mxu0 0
  %90 = vmatpush1.bf16.msra.mxu0 %v58
  %91 = vmatprep.subr.bf16.mxu0 0
  %92 = vmatpush2.bf16.msra.mxu0 0
  %93 = vmatprep.subr.bf16.mxu0 0
  %94 = vmatpush2.bf16.msra.mxu0 0
  %95 = vmatprep.subr.bf16.mxu0 0
  %96 = vmatpush2.bf16.msra.mxu0 0
  %97 = vmatprep.subr.bf16.mxu0 0
  %98 = vmatpush2.bf16.msra.mxu0 0
  %99 = vmatprep.subr.bf16.mxu0 0
  %100 = vmatpush2.bf16.msra.mxu0 0
  %101 = vmatprep.subr.bf16.mxu0 0
  %102 = vmatpush2.bf16.msra.mxu0 0
  %103 = vmatprep.subr.bf16.mxu0 0
  %104 = vmatpush2.bf16.msra.mxu0 0
  %105 = vmatprep.subr.bf16.mxu0 0
  %106 = vmatpush2.bf16.msra.mxu0 0
  %107 = vmatprep.mubr.bf16.mxu0 0
  %108 = vmatmul.mubr.bf16.gmra.mxu0 %v64
  %v109 = vpop.f32.mrf.mxu0
  %v110 = vadd.f32 %v48, %v109
  %v111 = vpop.f32.mrf.mxu0
  %v112 = vpop.f32.mrf.mxu0
  %v113 = vadd.f32 %v48, %v112
  %v114 = vpop.f32.mrf.mxu0
  %115 = vmatprep.mubr.bf16.mxu0 0
  %116 = vmatmul.mubr.bf16.gmra.mxu0 %v67
  %v117 = vpop.f32.mrf.mxu0
  %v118 = vadd.f32 %v48, %v117
  %v119 = vpop.f32.mrf.mxu0
  %v120 = vpop.f32.mrf.mxu0
  %v121 = vadd.f32 %v48, %v120
  %v122 = vpop.f32.mrf.mxu0
  %123 = vmatprep.mubr.bf16.mxu0 0
  %124 = vmatmul.mubr.bf16.gmra.mxu0 %v70
  %v125 = vpop.f32.mrf.mxu0
  %v126 = vadd.f32 %v48, %v125
  %v127 = vpop.f32.mrf.mxu0
  %v128 = vpop.f32.mrf.mxu0
  %v129 = vadd.f32 %v48, %v128
  %v130 = vpop.f32.mrf.mxu0
  %131 = vmatprep.mubr.bf16.mxu0 0
  %132 = vmatmul.mubr.bf16.gmra.mxu0 %v73
  %v133 = vpop.f32.mrf.mxu0
  %v134 = vadd.f32 %v48, %v133
  %v135 = vpop.f32.mrf.mxu0
  %v136 = vpop.f32.mrf.mxu0
  %v137 = vadd.f32 %v48, %v136
  %v138 = vpop.f32.mrf.mxu0
  %139 = vdwg.mxu0
  %v140 = vtanh.pop %v110
  %v141 = vtanh.pop %v113
  %v142 = vtanh.pop %v118
  %v143 = vtanh.pop %v121
  %v144 = vtanh.pop %v126
  %v145 = vtanh.pop %v129
  %v146 = vtanh.pop %v134
  %v147 = vtanh.pop %v137
  %v148 = vpack.c.bf16 %v141, %v140
  %v149 = vpack.c.bf16 %v143, %v142
  %v150 = vpack.c.bf16 %v145, %v144
  %v151 = vpack.c.bf16 %v147, %v146
  %v152 = vld [vmem:[%s3] sm:$0xf]
  %v153 = vld [vmem:[%s3 + $0x4] sm:$0xf]
  %v154 = vld [vmem:[%s3 + $0x8] sm:$0xf]
  %v155 = vld [vmem:[%s3 + $0xc] sm:$0xf]
  %v156 = vld [vmem:[%s3 + $0x10] sm:$0xf]
  %v157 = vld [vmem:[%s3 + $0x14] sm:$0xf]
  %v158 = vld [vmem:[%s3 + $0x18] sm:$0xf]
  %v159 = vld [vmem:[%s3 + $0x1c] sm:$0xf]
  %v160 = vld [vmem:[%s3 + $0x20] sm:$0xf]
  %v161 = vld [vmem:[%s3 + $0x24] sm:$0xf]
  %v162 = vld [vmem:[%s3 + $0x28] sm:$0xf]
  %v163 = vld [vmem:[%s3 + $0x2c] sm:$0xf]
  %v164 = vld [vmem:[%s3 + $0x30] sm:$0xf]
  %v165 = vld [vmem:[%s3 + $0x34] sm:$0xf]
  %v166 = vld [vmem:[%s3 + $0x38] sm:$0xf]
  %v167 = vld [vmem:[%s3 + $0x3c] sm:$0xf]
  %v168 = vld [vmem:[%s4] sm:$0x1]
  %v170 = vlaneseq
  %v171 = vshrl.u32 %v170, 7
  %v172 = vsub.s32 0, %v171
  %v173 = vrot.slane %v168, %v172
  %v191 = vunpack.c.l.b16 %v152
  %v192 = vunpack.c.l.b16 %v153
  %v193 = vunpack.c.l.b16 %v154
  %v194 = vunpack.c.l.b16 %v155
  %v195 = vunpack.c.l.b16 %v156
  %v196 = vunpack.c.l.b16 %v157
  %v197 = vunpack.c.l.b16 %v158
  %v198 = vunpack.c.l.b16 %v159
  %v199 = vunpack.c.l.b16 %v160
  %v200 = vunpack.c.l.b16 %v161
  %v201 = vunpack.c.l.b16 %v162
  %v202 = vunpack.c.l.b16 %v163
  %v203 = vunpack.c.l.b16 %v164
  %v204 = vunpack.c.l.b16 %v165
  %v205 = vunpack.c.l.b16 %v166
  %v206 = vunpack.c.l.b16 %v167
  %v207 = vpack.c.b16 %v192, %v191
  %v208 = vpack.c.b16 %v194, %v193
  %v209 = vpack.c.b16 %v196, %v195
  %v210 = vpack.c.b16 %v198, %v197
  %v211 = vpack.c.b16 %v200, %v199
  %v212 = vpack.c.b16 %v202, %v201
  %v213 = vpack.c.b16 %v204, %v203
  %v214 = vpack.c.b16 %v206, %v205
  %223 = vmatprep.subr.bf16.mxu0 0
  %224 = vmatpush1.bf16.msra.mxu0 %v214
  %225 = vmatprep.subr.bf16.mxu0 0
  %226 = vmatpush1.bf16.msra.mxu0 %v213
  %227 = vmatprep.subr.bf16.mxu0 0
  %228 = vmatpush1.bf16.msra.mxu0 %v212
  %229 = vmatprep.subr.bf16.mxu0 0
  %230 = vmatpush1.bf16.msra.mxu0 %v211
  %231 = vmatprep.subr.bf16.mxu0 0
  %232 = vmatpush1.bf16.msra.mxu0 %v210
  %233 = vmatprep.subr.bf16.mxu0 0
  %234 = vmatpush1.bf16.msra.mxu0 %v209
  %235 = vmatprep.subr.bf16.mxu0 0
  %236 = vmatpush1.bf16.msra.mxu0 %v208
  %237 = vmatprep.subr.bf16.mxu0 0
  %238 = vmatpush1.bf16.msra.mxu0 %v207
  %239 = vmatprep.subr.bf16.mxu0 0
  %240 = vmatpush2.bf16.msra.mxu0 0
  %241 = vmatprep.subr.bf16.mxu0 0
  %242 = vmatpush2.bf16.msra.mxu0 0
  %243 = vmatprep.subr.bf16.mxu0 0
  %244 = vmatpush2.bf16.msra.mxu0 0
  %245 = vmatprep.subr.bf16.mxu0 0
  %246 = vmatpush2.bf16.msra.mxu0 0
  %247 = vmatprep.subr.bf16.mxu0 0
  %248 = vmatpush2.bf16.msra.mxu0 0
  %249 = vmatprep.subr.bf16.mxu0 0
  %250 = vmatpush2.bf16.msra.mxu0 0
  %251 = vmatprep.subr.bf16.mxu0 0
  %252 = vmatpush2.bf16.msra.mxu0 0
  %253 = vmatprep.subr.bf16.mxu0 0
  %254 = vmatpush2.bf16.msra.mxu0 0
  %255 = vmatprep.mubr.bf16.mxu0 0
  %256 = vmatmul.mubr.bf16.gmra.mxu0 %v148
  %v257 = vpop.f32.mrf.mxu0
  %v258 = vadd.f32 %v173, %v257
  %v259 = vpop.f32.mrf.mxu0
  %v260 = vpop.f32.mrf.mxu0
  %v261 = vadd.f32 %v173, %v260
  %v262 = vpop.f32.mrf.mxu0
  %263 = vmatprep.mubr.bf16.mxu0 0
  %264 = vmatmul.mubr.bf16.gmra.mxu0 %v149
  %v265 = vpop.f32.mrf.mxu0
  %v266 = vadd.f32 %v173, %v265
  %v267 = vpop.f32.mrf.mxu0
  %v268 = vpop.f32.mrf.mxu0
  %v269 = vadd.f32 %v173, %v268
  %v270 = vpop.f32.mrf.mxu0
  %271 = vmatprep.mubr.bf16.mxu0 0
  %272 = vmatmul.mubr.bf16.gmra.mxu0 %v150
  %v273 = vpop.f32.mrf.mxu0
  %v274 = vadd.f32 %v173, %v273
  %v275 = vpop.f32.mrf.mxu0
  %v276 = vpop.f32.mrf.mxu0
  %v277 = vadd.f32 %v173, %v276
  %v278 = vpop.f32.mrf.mxu0
  %279 = vmatprep.mubr.bf16.mxu0 0
  %280 = vmatmul.mubr.bf16.gmra.mxu0 %v151
  %v281 = vpop.f32.mrf.mxu0
  %v282 = vadd.f32 %v173, %v281
  %v283 = vpop.f32.mrf.mxu0
  %v284 = vpop.f32.mrf.mxu0
  %v285 = vadd.f32 %v173, %v284
  %v286 = vpop.f32.mrf.mxu0
  %287 = vdwg.mxu0
  %v288 = vtanh.pop %v258
  %v289 = vtanh.pop %v261
  %v290 = vtanh.pop %v266
  %v291 = vtanh.pop %v269
  %v292 = vtanh.pop %v274
  %v293 = vtanh.pop %v277
  %v294 = vtanh.pop %v282
  %v295 = vtanh.pop %v285
  %v296 = vpack.c.bf16 %v289, %v288
  %v297 = vpack.c.bf16 %v291, %v290
  %v298 = vpack.c.bf16 %v293, %v292
  %v299 = vpack.c.bf16 %v295, %v294
  %v300 = vld [vmem:[%s5] sm:$0xf]
  %v301 = vld [vmem:[%s5 + $0x4] sm:$0xf]
  %v302 = vld [vmem:[%s5 + $0x8] sm:$0xf]
  %v303 = vld [vmem:[%s5 + $0xc] sm:$0xf]
  %v304 = vld [vmem:[%s5 + $0x10] sm:$0xf]
  %v305 = vld [vmem:[%s5 + $0x14] sm:$0xf]
  %v306 = vld [vmem:[%s5 + $0x18] sm:$0xf]
  %v307 = vld [vmem:[%s5 + $0x1c] sm:$0xf]
  %v308 = vld [vmem:[%s5 + $0x20] sm:$0xf]
  %v309 = vld [vmem:[%s5 + $0x24] sm:$0xf]
  %v310 = vld [vmem:[%s5 + $0x28] sm:$0xf]
  %v311 = vld [vmem:[%s5 + $0x2c] sm:$0xf]
  %v312 = vld [vmem:[%s5 + $0x30] sm:$0xf]
  %v313 = vld [vmem:[%s5 + $0x34] sm:$0xf]
  %v314 = vld [vmem:[%s5 + $0x38] sm:$0xf]
  %v315 = vld [vmem:[%s5 + $0x3c] sm:$0xf]
  %v316 = vld [vmem:[%s6] sm:$0x1]
  %v318 = vlaneseq
  %v319 = vshrl.u32 %v318, 7
  %v320 = vsub.s32 0, %v319
  %v321 = vrot.slane %v316, %v320
  %v339 = vunpack.c.l.b16 %v300
  %v340 = vunpack.c.l.b16 %v301
  %v341 = vunpack.c.l.b16 %v302
  %v342 = vunpack.c.l.b16 %v303
  %v343 = vunpack.c.l.b16 %v304
  %v344 = vunpack.c.l.b16 %v305
  %v345 = vunpack.c.l.b16 %v306
  %v346 = vunpack.c.l.b16 %v307
  %v347 = vunpack.c.l.b16 %v308
  %v348 = vunpack.c.l.b16 %v309
  %v349 = vunpack.c.l.b16 %v310
  %v350 = vunpack.c.l.b16 %v311
  %v351 = vunpack.c.l.b16 %v312
  %v352 = vunpack.c.l.b16 %v313
  %v353 = vunpack.c.l.b16 %v314
  %v354 = vunpack.c.l.b16 %v315
  %v355 = vpack.c.b16 %v340, %v339
  %v356 = vpack.c.b16 %v342, %v341
  %v357 = vpack.c.b16 %v344, %v343
  %v358 = vpack.c.b16 %v346, %v345
  %v359 = vpack.c.b16 %v348, %v347
  %v360 = vpack.c.b16 %v350, %v349
  %v361 = vpack.c.b16 %v352, %v351
  %v362 = vpack.c.b16 %v354, %v353
  %371 = vmatprep.subr.bf16.mxu0 0
  %372 = vmatpush1.bf16.msra.mxu0 %v362
  %373 = vmatprep.subr.bf16.mxu0 0
  %374 = vmatpush1.bf16.msra.mxu0 %v361
  %375 = vmatprep.subr.bf16.mxu0 0
  %376 = vmatpush1.bf16.msra.mxu0 %v360
  %377 = vmatprep.subr.bf16.mxu0 0
  %378 = vmatpush1.bf16.msra.mxu0 %v359
  %379 = vmatprep.subr.bf16.mxu0 0
  %380 = vmatpush1.bf16.msra.mxu0 %v358
  %381 = vmatprep.subr.bf16.mxu0 0
  %382 = vmatpush1.bf16.msra.mxu0 %v357
  %383 = vmatprep.subr.bf16.mxu0 0
  %384 = vmatpush1.bf16.msra.mxu0 %v356
  %385 = vmatprep.subr.bf16.mxu0 0
  %386 = vmatpush1.bf16.msra.mxu0 %v355
  %387 = vmatprep.subr.bf16.mxu0 0
  %388 = vmatpush2.bf16.msra.mxu0 0
  %389 = vmatprep.subr.bf16.mxu0 0
  %390 = vmatpush2.bf16.msra.mxu0 0
  %391 = vmatprep.subr.bf16.mxu0 0
  %392 = vmatpush2.bf16.msra.mxu0 0
  %393 = vmatprep.subr.bf16.mxu0 0
  %394 = vmatpush2.bf16.msra.mxu0 0
  %395 = vmatprep.subr.bf16.mxu0 0
  %396 = vmatpush2.bf16.msra.mxu0 0
  %397 = vmatprep.subr.bf16.mxu0 0
  %398 = vmatpush2.bf16.msra.mxu0 0
  %399 = vmatprep.subr.bf16.mxu0 0
  %400 = vmatpush2.bf16.msra.mxu0 0
  %401 = vmatprep.subr.bf16.mxu0 0
  %402 = vmatpush2.bf16.msra.mxu0 0
  %403 = vmatprep.mubr.bf16.mxu0 0
  %404 = vmatmul.mubr.bf16.gmra.mxu0 %v296
  %v405 = vpop.f32.mrf.mxu0
  %v406 = vadd.f32 %v321, %v405
  %v407 = vpop.f32.mrf.mxu0
  %v408 = vpop.f32.mrf.mxu0
  %v409 = vadd.f32 %v321, %v408
  %v410 = vpop.f32.mrf.mxu0
  %411 = vmatprep.mubr.bf16.mxu0 0
  %412 = vmatmul.mubr.bf16.gmra.mxu0 %v297
  %v413 = vpop.f32.mrf.mxu0
  %v414 = vadd.f32 %v321, %v413
  %v415 = vpop.f32.mrf.mxu0
  %v416 = vpop.f32.mrf.mxu0
  %v417 = vadd.f32 %v321, %v416
  %v418 = vpop.f32.mrf.mxu0
  %419 = vmatprep.mubr.bf16.mxu0 0
  %420 = vmatmul.mubr.bf16.gmra.mxu0 %v298
  %v421 = vpop.f32.mrf.mxu0
  %v422 = vadd.f32 %v321, %v421
  %v423 = vpop.f32.mrf.mxu0
  %v424 = vpop.f32.mrf.mxu0
  %v425 = vadd.f32 %v321, %v424
  %v426 = vpop.f32.mrf.mxu0
  %427 = vmatprep.mubr.bf16.mxu0 0
  %428 = vmatmul.mubr.bf16.gmra.mxu0 %v299
  %v429 = vpop.f32.mrf.mxu0
  %v430 = vadd.f32 %v321, %v429
  %v431 = vpop.f32.mrf.mxu0
  %v432 = vpop.f32.mrf.mxu0
  %v433 = vadd.f32 %v321, %v432
  %v434 = vpop.f32.mrf.mxu0
  %435 = vdwg.mxu0
  %vm436 = vcmask 31744
  %437 = vst.msk [vmem:[%s7] sm:$0xff] %vm436, %v406
  %438 = vst.msk [vmem:[%s7 + $0x8] sm:$0xff] %vm436, %v409
  %439 = vst.msk [vmem:[%s7 + $0x10] sm:$0xff] %vm436, %v414
  %440 = vst.msk [vmem:[%s7 + $0x18] sm:$0xff] %vm436, %v417
  %441 = vst.msk [vmem:[%s7 + $0x20] sm:$0xff] %vm436, %v422
  %442 = vst.msk [vmem:[%s7 + $0x28] sm:$0xff] %vm436, %v425
  %443 = vst.msk [vmem:[%s7 + $0x30] sm:$0xff] %vm436, %v430
  %444 = vst.msk [vmem:[%s7 + $0x38] sm:$0xff] %vm436, %v433
  // Predicated region
  $region30: #{deep_learning_forward.1} parent=0 // pred_check
    _
  $region31: #{deep_learning_forward.1} parent=0 // pred_check_branch
    %446 = sbr.rel (0) target = $region33
  $region32: #{deep_learning_forward.1} parent=0 // pred_region
    _
  $region33: #{deep_learning_forward.1} parent=0 // pred_fallthru
    _
  // Predicated region
  $region34: #{deep_learning_forward.1} parent=0 // pred_check
    _
  $region35: #{deep_learning_forward.1} parent=0 // pred_check_branch
    %448 = sbr.rel (0) target = $region37
  $region36: #{deep_learning_forward.1} parent=0 // pred_region
    _
  $region37: #{deep_learning_forward.1} parent=0 // pred_fallthru
    _

</llo_original>
